<compile_context>
chip_gen: v7x
topology: tpu7x:2x2x1
jax: 0.10.0
libtpu: 0.0.40
codegen_flags: <defaults>
</compile_context>

<pallas_src>
import functools

import numpy as np
import jax
import jax.numpy as jnp
from jax.experimental import pallas as pl
from jax.experimental.pallas import tpu as pltpu


def _level_dawn_kernel(xe_ref, xo_ref,
                       uw1_ref, uw2_ref, ua_ref,
                       pw1_ref, pw2_ref, pa_ref,
                       L_ref, H_ref,
                       *, k, wh):
    xe = xe_ref[0]                         # (C, TL) even samples, lanes = spatial
    xo = xo_ref[0]                         # (C, TL) odd samples
    C, TL = xe.shape
    pad_l = k // 2
    pad_r = k - 1 - pad_l

    ua = ua_ref[0]                         # U-branch PReLU scalar (SMEM)
    pa = pa_ref[0]                         # P-branch PReLU scalar (SMEM)
    uw2 = uw2_ref[...]                     # (C, C)  U-branch conv(1,1), (Cout, Cin)
    pw2 = pw2_ref[...]

    # In-row width index of every lane position (rows of length wh lie
    # back-to-back along the lane axis); (1, TL), broadcast in the compares.
    col_w = jax.lax.broadcasted_iota(jnp.int32, (1, TL), 1)
    if wh & (wh - 1) == 0:
        col_w = col_w & (wh - 1)
    else:
        col_w = col_w % wh

    # Reflection-edge masks, hoisted once and reused by both lifting branches.
    left_masks = [col_w == w for w in range(pad_l)]
    right_masks = [col_w == (wh - 1 - dw) for dw in range(pad_r)]

    def rolled(x2, d):
        # y[:, m] == x2[:, (m + d) mod TL]; XLU lane rotation, no VMEM copy.
        dd = (-d) % TL
        if dd == 0:
            return x2
        return pltpu.roll(x2, shift=dd, axis=1)

    def conv1k(x2, w1_ref):
        # ReflectionPad2d + Conv2d(C, C, (1, k)) as k per-tap (C,C)@(C,TL) dots.
        # Taps are whole-slab lane rolls; the few row-crossing lanes are fixed
        # with the hoisted reflection masks (valid because pad < wh).
        cache = {}

        def sh(d):
            if d not in cache:
                cache[d] = rolled(x2, d)
            return cache[d]

        acc = None
        for j in range(k):
            s = j - pad_l                  # tap j reads inp[w + s], reflected
            t = sh(s)
            if s < 0:                      # left edge: w + s < 0 -> reflect
                for w in range(-s):
                    t = jnp.where(left_masks[w], sh(-(w + s) - w), t)
            elif s > 0:                    # right edge: w + s >= wh -> reflect
                for dw in range(s):
                    w = wh - 1 - dw
                    t = jnp.where(right_masks[dw],
                                  sh(2 * (wh - 1) - (w + s) - w), t)
            p = jnp.dot(w1_ref[j], t, preferred_element_type=jnp.float32)
            acc = p if acc is None else acc + p
        return acc

    def branch(inp, w1_ref, a, w2):
        # conv(1,k) -> PReLU -> conv(1,1) -> Tanh, spatial on lanes throughout.
        acc = conv1k(inp, w1_ref)
        acc = jnp.where(acc >= 0.0, acc, a * acc)                   # PReLU
        y = jnp.dot(w2, acc, preferred_element_type=jnp.float32)    # 1x1 conv
        return jnp.tanh(y)

    # modified lifting: c = x_even + U(x_odd); d = x_odd - P(c)
    c = xe + branch(xo, uw1_ref, ua, uw2)
    d = xo - branch(c, pw1_ref, pa, pw2)

    L_ref[0] = c
    H_ref[0] = d


def _lane_tile(Hh, Wh, C, target_tile_bytes, min_blocks=1):
    """Lane tile TL = TH*Wh (TH | Hh): largest one fitting the VMEM budget with
    TL a multiple of 128; falls back to the full extent (always legal)."""
    M2 = Hh * Wh
    aligned = [th for th in range(1, Hh + 1)
               if Hh % th == 0 and (th * Wh) % 128 == 0]
    max_th = max(1, target_tile_bytes // max(1, Wh * C * 4))
    pref = [th for th in aligned if th <= max_th and Hh // th >= min_blocks]
    if pref:
        return max(pref) * Wh
    fit = [th for th in aligned if th <= max_th]
    if fit:
        return max(fit) * Wh
    if aligned:
        return min(aligned) * Wh
    return M2


def level_dawn_forward(x, params, *, kernel_size=3, regu_details=0.1,
                       regu_approx=0.1, target_tile_bytes=1 << 20):
    """x: (B, C, H, W) float32 (PyTorch NCHW).

    Returns (L, H, r): L, H in NCHW of shape (B, C, H, W//2), r a scalar."""
    uw1, uw2, ua, pw1, pw2, pa = params
    B, C, Hh, W = x.shape
    Wh = W // 2
    M2 = Hh * Wh
    k = kernel_size
    pad_l = k // 2
    pad_r = k - 1 - pad_l
    # Circular-roll + masked-reflection scheme needs the pad to stay inside a row.
    assert pad_l < Wh and pad_r < Wh, "reflection pad must be < W//2"

    # Even/odd split on native NCHW (no channel transpose); reshapes are free
    # (contiguous merges), so no extra HBM relayout passes on input or output.
    xe = x[:, :, :, 0::2].reshape(B, C, M2)
    xo = x[:, :, :, 1::2].reshape(B, C, M2)

    # Per-tap conv(1,k) weights as (k, Cout, Cin); conv(1,1) as (Cout, Cin).
    uw1k = jnp.transpose(uw1, (0, 2, 1))
    pw1k = jnp.transpose(pw1, (0, 2, 1))
    uw2t = uw2.T
    pw2t = pw2.T

    min_blocks = 2 if B == 1 else 1        # keep both v7x TensorCores busy
    TL = _lane_tile(Hh, Wh, C, target_tile_bytes, min_blocks=min_blocks)
    n_j = M2 // TL

    # Scoped-VMEM limit: double-buffered in/out slabs + rolled taps + masks,
    # with generous headroom below v7x's 64 MiB physical VMEM.
    tile_bytes = C * TL * 4
    vmem_limit = int(min(40 * 1024 * 1024,
                         max(16 * 1024 * 1024, 32 * tile_bytes)))

    kern = functools.partial(_level_dawn_kernel, k=k, wh=Wh)

    grid_spec = pltpu.PrefetchScalarGridSpec(
        num_scalar_prefetch=0,
        grid=(B, n_j),
        in_specs=[
            pl.BlockSpec((1, C, TL), lambda b, j: (b, 0, j)),       # x_even slab
            pl.BlockSpec((1, C, TL), lambda b, j: (b, 0, j)),       # x_odd slab
            pl.BlockSpec((k, C, C), lambda b, j: (0, 0, 0)),        # U conv(1,k)
            pl.BlockSpec((C, C), lambda b, j: (0, 0)),              # U conv(1,1)
            pl.BlockSpec(memory_space=pltpu.MemorySpace.SMEM),      # U PReLU a
            pl.BlockSpec((k, C, C), lambda b, j: (0, 0, 0)),        # P conv(1,k)
            pl.BlockSpec((C, C), lambda b, j: (0, 0)),              # P conv(1,1)
            pl.BlockSpec(memory_space=pltpu.MemorySpace.SMEM),      # P PReLU a
        ],
        out_specs=(
            pl.BlockSpec((1, C, TL), lambda b, j: (b, 0, j)),       # L slab
            pl.BlockSpec((1, C, TL), lambda b, j: (b, 0, j)),       # H slab
        ),
    )

    L2, H2 = pl.pallas_call(
        kern,
        out_shape=(jax.ShapeDtypeStruct((B, C, M2), jnp.float32),
                   jax.ShapeDtypeStruct((B, C, M2), jnp.float32)),
        grid_spec=grid_spec,
        compiler_params=pltpu.CompilerParams(
            dimension_semantics=("parallel", "parallel"),
            vmem_limit_bytes=vmem_limit),
    )(xe, xo, uw1k, uw2t, ua, pw1k, pw2t, pa)

    # Regularizer computed in the wrapper (keeps the kernel grid parallel):
    # torch.dist(scalar, scalar, p=2) == |a - b|
    rd = regu_details * jnp.mean(jnp.abs(H2))
    rc = regu_approx * jnp.abs(jnp.mean(L2) - jnp.mean(x))
    r = rd + rc

    L = L2.reshape(B, C, Hh, Wh)           # free reshapes, already NCHW order
    Hd = H2.reshape(B, C, Hh, Wh)
    return L, Hd, r


def init_params(key, C, k):
    # Synthetic, deterministic parameters.  Equivalent torch shapes:
    #   conv(1,k) weight (Cout, Cin, 1, k)  -> stored as (k, Cin, Cout)
    #       w[j, ci, co] == torch_w[co, ci, 0, j]
    #   conv(1,1) weight (Cout, Cin, 1, 1)  -> stored as (Cin, Cout)
    #   nn.PReLU() single parameter, init 0.25
    ks = jax.random.split(key, 4)
    b1 = 1.0 / np.sqrt(C * k)
    b2 = 1.0 / np.sqrt(C)
    uw1 = jax.random.uniform(ks[0], (k, C, C), jnp.float32, -b1, b1)
    uw2 = jax.random.uniform(ks[1], (C, C), jnp.float32, -b2, b2)
    pw1 = jax.random.uniform(ks[2], (k, C, C), jnp.float32, -b1, b1)
    pw2 = jax.random.uniform(ks[3], (C, C), jnp.float32, -b2, b2)
    ua = jnp.array([0.25], jnp.float32)
    pa = jnp.array([0.25], jnp.float32)
    return uw1, uw2, ua, pw1, pw2, pa


def ref_forward(x, params, *, kernel_size=3, regu_details=0.1, regu_approx=0.1):
    """Pure-JAX reference of LevelDAWN.forward (modified lifting, simple_lifting=False)."""
    uw1, uw2, ua, pw1, pw2, pa = params
    k = kernel_size
    B, C, Hh, W = x.shape
    Wh = W // 2
    pad_l = k // 2
    pad_r = k - 1 - pad_l
    xn = jnp.transpose(x, (0, 2, 3, 1))
    xe = xn[:, :, 0::2, :]
    xo = xn[:, :, 1::2, :]

    def branch(inp, w1, a, w2):
        p = jnp.pad(inp, ((0, 0), (0, 0), (pad_l, pad_r), (0, 0)), mode="reflect")
        out = sum(jnp.einsum("bhwc,cd->bhwd", p[:, :, j:j + Wh, :], w1[j],
                             precision=jax.lax.Precision.HIGHEST)
                  for j in range(k))
        out = jnp.where(out >= 0, out, a[0] * out)
        out = jnp.einsum("bhwc,cd->bhwd", out, w2,
                         precision=jax.lax.Precision.HIGHEST)
        return jnp.tanh(out)

    c = xe + branch(xo, uw1, ua, uw2)
    d = xo - branch(c, pw1, pa, pw2)
    rd = regu_details * jnp.mean(jnp.abs(d))
    rc = regu_approx * jnp.abs(jnp.mean(c) - jnp.mean(x))
    L = jnp.transpose(c, (0, 3, 1, 2))
    Hd = jnp.transpose(d, (0, 3, 1, 2))
    return L, Hd, rd + rc


if __name__ == "__main__":
    key = jax.random.PRNGKey(0)
    kx, kp = jax.random.split(key)

    B, C, Hh, W = 2, 4, 16, 16          # x: NCHW, in_planes = C = 4
    KSIZE = 3
    REGU_DETAILS = 0.1
    REGU_APPROX = 0.1

    x = jax.random.normal(kx, (B, C, Hh, W), jnp.float32)
    params = init_params(kp, C, KSIZE)

    L, Hd, r = level_dawn_forward(x, params, kernel_size=KSIZE,
                                  regu_details=REGU_DETAILS,
                                  regu_approx=REGU_APPROX)
    jax.block_until_ready((L, Hd, r))

    # correctness check against a pure-JAX reference
    Lr, Hr, rr = ref_forward(x, params, kernel_size=KSIZE,
                             regu_details=REGU_DETAILS,
                             regu_approx=REGU_APPROX)
    np.testing.assert_allclose(np.asarray(L), np.asarray(Lr), atol=2e-3, rtol=2e-3)
    np.testing.assert_allclose(np.asarray(Hd), np.asarray(Hr), atol=2e-3, rtol=2e-3)
    np.testing.assert_allclose(float(r), float(rr), atol=2e-3, rtol=2e-3)

    print("KERNEL_OK")
</pallas_src>

<mosaic_0001>
module attributes {stable_mosaic.version = 11 : i64} {
  func.func @_level_dawn_kernel(%arg0: i32, %arg1: i32, %arg2: memref<1x4x128xf32, #tpu.memory_space<vmem>>, %arg3: memref<1x4x128xf32, #tpu.memory_space<vmem>>, %arg4: memref<3x4x4xf32, #tpu.memory_space<vmem>>, %arg5: memref<4x4xf32, #tpu.memory_space<vmem>>, %arg6: memref<1xf32, #tpu.memory_space<smem>>, %arg7: memref<3x4x4xf32, #tpu.memory_space<vmem>>, %arg8: memref<4x4xf32, #tpu.memory_space<vmem>>, %arg9: memref<1xf32, #tpu.memory_space<smem>>, %arg10: memref<1x4x128xf32, #tpu.memory_space<vmem>>, %arg11: memref<1x4x128xf32, #tpu.memory_space<vmem>>) attributes {dimension_semantics = [#tpu.dimension_semantics<parallel>, #tpu.dimension_semantics<parallel>], iteration_bounds = array<i64: 2, 1>, scalar_prefetch = 0 : i64, scratch_operands = 0 : i64, tpu.core_type = #tpu.core_type<tc>, window_params = [{transform_indices = @transform_0, window_bounds = array<i64: 1, 4, 128>}, {transform_indices = @transform_1, window_bounds = array<i64: 1, 4, 128>}, {pipeline_mode = #tpu.pipeline_mode<synchronous>, transform_indices = @transform_2, window_bounds = array<i64: 3, 4, 4>}, {pipeline_mode = #tpu.pipeline_mode<synchronous>, transform_indices = @transform_3, window_bounds = array<i64: 4, 4>}, {transform_indices = @transform_4, window_bounds = array<i64: 1>}, {pipeline_mode = #tpu.pipeline_mode<synchronous>, transform_indices = @transform_5, window_bounds = array<i64: 3, 4, 4>}, {pipeline_mode = #tpu.pipeline_mode<synchronous>, transform_indices = @transform_6, window_bounds = array<i64: 4, 4>}, {transform_indices = @transform_7, window_bounds = array<i64: 1>}, {transform_indices = @transform_8, window_bounds = array<i64: 1, 4, 128>}, {transform_indices = @transform_9, window_bounds = array<i64: 1, 4, 128>}]} {
    %c0 = arith.constant 0 : index
    %c0_0 = arith.constant 0 : index
    %c0_1 = arith.constant 0 : index
    %0 = vector.load %arg2[%c0, %c0_0, %c0_1] : memref<1x4x128xf32, #tpu.memory_space<vmem>>, vector<1x4x128xf32>
    %1 = vector.shape_cast %0 : vector<1x4x128xf32> to vector<4x128xf32>
    %c0_2 = arith.constant 0 : index
    %c0_3 = arith.constant 0 : index
    %c0_4 = arith.constant 0 : index
    %2 = vector.load %arg3[%c0_2, %c0_3, %c0_4] : memref<1x4x128xf32, #tpu.memory_space<vmem>>, vector<1x4x128xf32>
    %3 = vector.shape_cast %2 : vector<1x4x128xf32> to vector<4x128xf32>
    %c0_5 = arith.constant 0 : index
    %4 = memref.load %arg6[%c0_5] : memref<1xf32, #tpu.memory_space<smem>>
    %c0_6 = arith.constant 0 : index
    %5 = memref.load %arg9[%c0_6] : memref<1xf32, #tpu.memory_space<smem>>
    %c0_7 = arith.constant 0 : index
    %c0_8 = arith.constant 0 : index
    %6 = vector.load %arg5[%c0_7, %c0_8] : memref<4x4xf32, #tpu.memory_space<vmem>>, vector<4x4xf32>
    %c0_9 = arith.constant 0 : index
    %c0_10 = arith.constant 0 : index
    %7 = vector.load %arg8[%c0_9, %c0_10] : memref<4x4xf32, #tpu.memory_space<vmem>>, vector<4x4xf32>
    %8 = tpu.iota {dimensions = array<i32: 1>} : vector<1x128xi32>
    %c7_i32 = arith.constant 7 : i32
    %9 = vector.broadcast %c7_i32 : i32 to vector<1x128xi32>
    %10 = arith.andi %8, %9 : vector<1x128xi32>
    %c0_i32 = arith.constant 0 : i32
    %11 = vector.broadcast %c0_i32 : i32 to vector<1x128xi32>
    %12 = arith.cmpi eq, %10, %11 : vector<1x128xi32>
    %c7_i32_11 = arith.constant 7 : i32
    %13 = vector.broadcast %c7_i32_11 : i32 to vector<1x128xi32>
    %14 = arith.cmpi eq, %10, %13 : vector<1x128xi32>
    %c1_i32 = arith.constant 1 : i32
    %15 = tpu.dynamic_rotate %3 by %c1_i32 dim 1 : vector<4x128xf32>, i32 -> vector<4x128xf32>
    %c127_i32 = arith.constant 127 : i32
    %16 = tpu.dynamic_rotate %3 by %c127_i32 dim 1 : vector<4x128xf32>, i32 -> vector<4x128xf32>
    %17 = vector.shape_cast %12 : vector<1x128xi1> to vector<1x128xi1>
    %18 = vector.broadcast %17 : vector<1x128xi1> to vector<4x128xi1>
    %19 = arith.select %18, %16, %15 : vector<4x128xi1>, vector<4x128xf32>
    %c0_12 = arith.constant 0 : index
    %c0_13 = arith.constant 0 : index
    %c0_14 = arith.constant 0 : index
    %20 = vector.load %arg4[%c0_12, %c0_13, %c0_14] : memref<3x4x4xf32, #tpu.memory_space<vmem>>, vector<1x4x4xf32>
    %21 = vector.shape_cast %20 : vector<1x4x4xf32> to vector<4x4xf32>
    %cst = arith.constant dense<0.000000e+00> : vector<4x128xf32>
    %22 = tpu.matmul %21, %19, %cst {dimension_numbers = #tpu.dot_dimension_numbers<[1], [0], [0], [1], [0, 0, 1, 1], [], []>} : vector<4x4xf32>, vector<4x128xf32>, vector<4x128xf32> -> vector<4x128xf32>
    %c1 = arith.constant 1 : index
    %c0_15 = arith.constant 0 : index
    %c0_16 = arith.constant 0 : index
    %23 = vector.load %arg4[%c1, %c0_15, %c0_16] : memref<3x4x4xf32, #tpu.memory_space<vmem>>, vector<1x4x4xf32>
    %24 = vector.shape_cast %23 : vector<1x4x4xf32> to vector<4x4xf32>
    %cst_17 = arith.constant dense<0.000000e+00> : vector<4x128xf32>
    %25 = tpu.matmul %24, %3, %cst_17 {dimension_numbers = #tpu.dot_dimension_numbers<[1], [0], [0], [1], [0, 0, 1, 1], [], []>} : vector<4x4xf32>, vector<4x128xf32>, vector<4x128xf32> -> vector<4x128xf32>
    %26 = arith.addf %22, %25 : vector<4x128xf32>
    %27 = vector.shape_cast %14 : vector<1x128xi1> to vector<1x128xi1>
    %28 = vector.broadcast %27 : vector<1x128xi1> to vector<4x128xi1>
    %29 = arith.select %28, %15, %16 : vector<4x128xi1>, vector<4x128xf32>
    %c2 = arith.constant 2 : index
    %c0_18 = arith.constant 0 : index
    %c0_19 = arith.constant 0 : index
    %30 = vector.load %arg4[%c2, %c0_18, %c0_19] : memref<3x4x4xf32, #tpu.memory_space<vmem>>, vector<1x4x4xf32>
    %31 = vector.shape_cast %30 : vector<1x4x4xf32> to vector<4x4xf32>
    %cst_20 = arith.constant dense<0.000000e+00> : vector<4x128xf32>
    %32 = tpu.matmul %31, %29, %cst_20 {dimension_numbers = #tpu.dot_dimension_numbers<[1], [0], [0], [1], [0, 0, 1, 1], [], []>} : vector<4x4xf32>, vector<4x128xf32>, vector<4x128xf32> -> vector<4x128xf32>
    %33 = arith.addf %26, %32 : vector<4x128xf32>
    %cst_21 = arith.constant 0.000000e+00 : f32
    %34 = vector.broadcast %cst_21 : f32 to vector<4x128xf32>
    %35 = arith.cmpf oge, %33, %34 : vector<4x128xf32>
    %36 = vector.broadcast %4 : f32 to vector<4x128xf32>
    %37 = arith.mulf %36, %33 : vector<4x128xf32>
    %38 = arith.select %35, %33, %37 : vector<4x128xi1>, vector<4x128xf32>
    %cst_22 = arith.constant dense<0.000000e+00> : vector<4x128xf32>
    %39 = tpu.matmul %6, %38, %cst_22 {dimension_numbers = #tpu.dot_dimension_numbers<[1], [0], [0], [1], [0, 0, 1, 1], [], []>} : vector<4x4xf32>, vector<4x128xf32>, vector<4x128xf32> -> vector<4x128xf32>
    %40 = math.tanh %39 : vector<4x128xf32>
    %41 = arith.addf %1, %40 : vector<4x128xf32>
    %c1_i32_23 = arith.constant 1 : i32
    %42 = tpu.dynamic_rotate %41 by %c1_i32_23 dim 1 : vector<4x128xf32>, i32 -> vector<4x128xf32>
    %c127_i32_24 = arith.constant 127 : i32
    %43 = tpu.dynamic_rotate %41 by %c127_i32_24 dim 1 : vector<4x128xf32>, i32 -> vector<4x128xf32>
    %44 = vector.shape_cast %12 : vector<1x128xi1> to vector<1x128xi1>
    %45 = vector.broadcast %44 : vector<1x128xi1> to vector<4x128xi1>
    %46 = arith.select %45, %43, %42 : vector<4x128xi1>, vector<4x128xf32>
    %c0_25 = arith.constant 0 : index
    %c0_26 = arith.constant 0 : index
    %c0_27 = arith.constant 0 : index
    %47 = vector.load %arg7[%c0_25, %c0_26, %c0_27] : memref<3x4x4xf32, #tpu.memory_space<vmem>>, vector<1x4x4xf32>
    %48 = vector.shape_cast %47 : vector<1x4x4xf32> to vector<4x4xf32>
    %cst_28 = arith.constant dense<0.000000e+00> : vector<4x128xf32>
    %49 = tpu.matmul %48, %46, %cst_28 {dimension_numbers = #tpu.dot_dimension_numbers<[1], [0], [0], [1], [0, 0, 1, 1], [], []>} : vector<4x4xf32>, vector<4x128xf32>, vector<4x128xf32> -> vector<4x128xf32>
    %c1_29 = arith.constant 1 : index
    %c0_30 = arith.constant 0 : index
    %c0_31 = arith.constant 0 : index
    %50 = vector.load %arg7[%c1_29, %c0_30, %c0_31] : memref<3x4x4xf32, #tpu.memory_space<vmem>>, vector<1x4x4xf32>
    %51 = vector.shape_cast %50 : vector<1x4x4xf32> to vector<4x4xf32>
    %cst_32 = arith.constant dense<0.000000e+00> : vector<4x128xf32>
    %52 = tpu.matmul %51, %41, %cst_32 {dimension_numbers = #tpu.dot_dimension_numbers<[1], [0], [0], [1], [0, 0, 1, 1], [], []>} : vector<4x4xf32>, vector<4x128xf32>, vector<4x128xf32> -> vector<4x128xf32>
    %53 = arith.addf %49, %52 : vector<4x128xf32>
    %54 = vector.shape_cast %14 : vector<1x128xi1> to vector<1x128xi1>
    %55 = vector.broadcast %54 : vector<1x128xi1> to vector<4x128xi1>
    %56 = arith.select %55, %42, %43 : vector<4x128xi1>, vector<4x128xf32>
    %c2_33 = arith.constant 2 : index
    %c0_34 = arith.constant 0 : index
    %c0_35 = arith.constant 0 : index
    %57 = vector.load %arg7[%c2_33, %c0_34, %c0_35] : memref<3x4x4xf32, #tpu.memory_space<vmem>>, vector<1x4x4xf32>
    %58 = vector.shape_cast %57 : vector<1x4x4xf32> to vector<4x4xf32>
    %cst_36 = arith.constant dense<0.000000e+00> : vector<4x128xf32>
    %59 = tpu.matmul %58, %56, %cst_36 {dimension_numbers = #tpu.dot_dimension_numbers<[1], [0], [0], [1], [0, 0, 1, 1], [], []>} : vector<4x4xf32>, vector<4x128xf32>, vector<4x128xf32> -> vector<4x128xf32>
    %60 = arith.addf %53, %59 : vector<4x128xf32>
    %cst_37 = arith.constant 0.000000e+00 : f32
    %61 = vector.broadcast %cst_37 : f32 to vector<4x128xf32>
    %62 = arith.cmpf oge, %60, %61 : vector<4x128xf32>
    %63 = vector.broadcast %5 : f32 to vector<4x128xf32>
    %64 = arith.mulf %63, %60 : vector<4x128xf32>
    %65 = arith.select %62, %60, %64 : vector<4x128xi1>, vector<4x128xf32>
    %cst_38 = arith.constant dense<0.000000e+00> : vector<4x128xf32>
    %66 = tpu.matmul %7, %65, %cst_38 {dimension_numbers = #tpu.dot_dimension_numbers<[1], [0], [0], [1], [0, 0, 1, 1], [], []>} : vector<4x4xf32>, vector<4x128xf32>, vector<4x128xf32> -> vector<4x128xf32>
    %67 = math.tanh %66 : vector<4x128xf32>
    %68 = arith.subf %3, %67 : vector<4x128xf32>
    %c0_39 = arith.constant 0 : index
    %c0_40 = arith.constant 0 : index
    %c0_41 = arith.constant 0 : index
    %69 = vector.load %arg10[%c0_39, %c0_40, %c0_41] : memref<1x4x128xf32, #tpu.memory_space<vmem>>, vector<1x4x128xf32>
    %70 = vector.shape_cast %69 : vector<1x4x128xf32> to vector<4x128xf32>
    %71 = vector.shape_cast %41 : vector<4x128xf32> to vector<1x4x128xf32>
    tpu.vector_store %arg10[%c0_39, %c0_40, %c0_41], %71 {strides = array<i32>} : memref<1x4x128xf32, #tpu.memory_space<vmem>>, vector<1x4x128xf32>,
    %c0_42 = arith.constant 0 : index
    %c0_43 = arith.constant 0 : index
    %c0_44 = arith.constant 0 : index
    %72 = vector.load %arg11[%c0_42, %c0_43, %c0_44] : memref<1x4x128xf32, #tpu.memory_space<vmem>>, vector<1x4x128xf32>
    %73 = vector.shape_cast %72 : vector<1x4x128xf32> to vector<4x128xf32>
    %74 = vector.shape_cast %68 : vector<4x128xf32> to vector<1x4x128xf32>
    tpu.vector_store %arg11[%c0_42, %c0_43, %c0_44], %74 {strides = array<i32>} : memref<1x4x128xf32, #tpu.memory_space<vmem>>, vector<1x4x128xf32>,
    return
  }
  func.func @transform_0(%arg0: i32, %arg1: i32) -> (i32, i32, i32) {
    %c0_i32 = arith.constant 0 : i32
    %c0_i32_0 = arith.constant 0 : i32
    return %arg0, %c0_i32, %arg1 : i32, i32, i32
  }
  func.func @transform_1(%arg0: i32, %arg1: i32) -> (i32, i32, i32) {
    %c0_i32 = arith.constant 0 : i32
    %c0_i32_0 = arith.constant 0 : i32
    return %arg0, %c0_i32, %arg1 : i32, i32, i32
  }
  func.func @transform_2(%arg0: i32, %arg1: i32) -> (i32, i32, i32) {
    %c0_i32 = arith.constant 0 : i32
    %c0_i32_0 = arith.constant 0 : i32
    %c0_i32_1 = arith.constant 0 : i32
    %c0_i32_2 = arith.constant 0 : i32
    return %c0_i32, %c0_i32_0, %c0_i32_1 : i32, i32, i32
  }
  func.func @transform_3(%arg0: i32, %arg1: i32) -> (i32, i32) {
    %c0_i32 = arith.constant 0 : i32
    %c0_i32_0 = arith.constant 0 : i32
    %c0_i32_1 = arith.constant 0 : i32
    return %c0_i32, %c0_i32_0 : i32, i32
  }
  func.func @transform_4(%arg0: i32, %arg1: i32) -> i32 {
    %c0_i32 = arith.constant 0 : i32
    %c0_i32_0 = arith.constant 0 : i32
    return %c0_i32 : i32
  }
  func.func @transform_5(%arg0: i32, %arg1: i32) -> (i32, i32, i32) {
    %c0_i32 = arith.constant 0 : i32
    %c0_i32_0 = arith.constant 0 : i32
    %c0_i32_1 = arith.constant 0 : i32
    %c0_i32_2 = arith.constant 0 : i32
    return %c0_i32, %c0_i32_0, %c0_i32_1 : i32, i32, i32
  }
  func.func @transform_6(%arg0: i32, %arg1: i32) -> (i32, i32) {
    %c0_i32 = arith.constant 0 : i32
    %c0_i32_0 = arith.constant 0 : i32
    %c0_i32_1 = arith.constant 0 : i32
    return %c0_i32, %c0_i32_0 : i32, i32
  }
  func.func @transform_7(%arg0: i32, %arg1: i32) -> i32 {
    %c0_i32 = arith.constant 0 : i32
    %c0_i32_0 = arith.constant 0 : i32
    return %c0_i32 : i32
  }
  func.func @transform_8(%arg0: i32, %arg1: i32) -> (i32, i32, i32) {
    %c0_i32 = arith.constant 0 : i32
    %c0_i32_0 = arith.constant 0 : i32
    return %arg0, %c0_i32, %arg1 : i32, i32, i32
  }
  func.func @transform_9(%arg0: i32, %arg1: i32) -> (i32, i32, i32) {
    %c0_i32 = arith.constant 0 : i32
    %c0_i32_0 = arith.constant 0 : i32
    return %arg0, %c0_i32, %arg1 : i32, i32, i32
  }
}

</mosaic_0001>

<llo_original>
// kernel: tpu_custom_call.1
$region0: #{tpu_custom_call.1}
  #allocation0 [shape = 'u32[]', space=smem, size = 0x4, offset = 0x4, fixed_abs, tag = 'smem constant byte address 0x4 - core index']
  #allocation1 [shape = 'u32[144,128]{1,0:T(1,128)}', space=vmem, size = 0x12000, scoped, tag = 'internal scratch']
  #allocation2 [shape = 'f32[1]{0:T(128)S(6)}', space=smem, size = 0x200, scoped, tag = 'scoped memory for tpu_custom_call.1']
  #allocation3 [shape = 'f32[1]{0:T(128)S(6)}', space=smem, size = 0x200, scoped, tag = 'scoped memory for tpu_custom_call.1']
  %s0 = inlined_call_operand.hbm [shape: f32[2,4,128], index: 0, kind: input, shape index: {}]
  %s1 = inlined_call_operand.hbm [shape: f32[2,4,128], index: 1, kind: input, shape index: {}]
  %s2 = inlined_call_operand.vmem [shape: f32[3,4,4], index: 2, kind: input, shape index: {}]
  %s3 = inlined_call_operand.vmem [shape: f32[4,4], index: 3, kind: input, shape index: {}]
  %s4 = inlined_call_operand.<no memory space> [shape: f32[1], index: 4, kind: input, shape index: {}]
  %s5 = inlined_call_operand.hbm [shape: f32[3,4,4], index: 5, kind: input, shape index: {}]
  %s6 = inlined_call_operand.vmem [shape: f32[4,4], index: 6, kind: input, shape index: {}]
  %s7 = inlined_call_operand.<no memory space> [shape: f32[1], index: 7, kind: input, shape index: {}]
  %s8 = inlined_call_operand.hbm [shape: f32[2,4,128], index: 8, kind: output, shape index: {0}]
  %s9 = inlined_call_operand.hbm [shape: f32[2,4,128], index: 9, kind: output, shape index: {1}]
  %10 = xla_tuple %s8, %s9
  %s11 = sld [smem:[#allocation0]]
  $region85: #{tpu_custom_call.1} parent=0
    _
  %s13 = ssub.s32 1, %s11
  %s14 = scalar_select 0, %s13, %s11
  %15 = sst [smem:[#allocation2]] %s4
  %16 = sst [smem:[#allocation3]] %s7
  $region1: #{tpu_custom_call.1} parent=0
    #allocation4 [shape = 'u8[4096]{0}', space=vmem, size = 0x1000, scoped, tag = 'input window, operand 0']
    #allocation5 [shape = 's32[2]{0}', space=sflag, size = 0x8, scoped, tag = 'scoped memory for tpu_custom_call.1']
    #allocation6 [shape = 's32[2]{0}', space=sflag, size = 0x8, scoped, tag = 'scoped memory for tpu_custom_call.1']
    #allocation7 [shape = 'u8[4096]{0}', space=vmem, size = 0x1000, scoped, tag = 'input window, operand 1']
    #allocation8 [shape = 's32[2]{0}', space=sflag, size = 0x8, scoped, tag = 'scoped memory for tpu_custom_call.1']
    #allocation9 [shape = 'u8[6144]{0}', space=vmem, size = 0x1800, scoped, tag = 'input window, operand 5, single buffered']
    #allocation10 [shape = 'u8[4096]{0}', space=vmem, size = 0x1000, scoped, tag = 'output window, operand 0']
    #allocation11 [shape = 'u8[4096]{0}', space=vmem, size = 0x1000, scoped, tag = 'output window, operand 1']
    #allocation12 [shape = 's32[2]{0}', space=sflag, size = 0x8, scoped, tag = 'scoped memory for tpu_custom_call.1']
    %17 = vsyncpa [#allocation5], 0
    %s18 = scalar_lea.sflag [#allocation5], 1
    %19 = vsyncpa %s18, 0
    %20 = vsyncpa [#allocation8], 0
    %s21 = scalar_lea.sflag [#allocation8], 1
    %22 = vsyncpa %s21, 0
    %23 = vsyncpa [#allocation6], 0
    %s24 = scalar_lea.sflag [#allocation6], 1
    %25 = vsyncpa %s24, 0
    %26 = vsyncpa [#allocation12], 0
    %s27 = scalar_lea.sflag [#allocation12], 1
    %28 = vsyncpa %s27, 0
    loop: start=0, step=1, limit=4
    $region2: #{tpu_custom_call.1} parent=1 // loop_pre_header
      _
    $region3: #{tpu_custom_call.1} parent=1 // loop_header
      %s30 = sphi 0, %s34
      %p31 = scmp.ge.s32.totalorder %s30, 4
      %s37 = sphi 0, %s49
      %s38 = sphi 0, %s45
      %s39 = sphi 0, %s37
      %s40 = sphi 0, %s38
      %s41 = sphi 0, %s39
      %s42 = sphi 0, %s40
      %s54 = sphi 0, %s56
      %s57 = sphi 0, %s54
      %s58 = sphi 0, %s57
      %s74 = sphi 0, %s58
      %s82 = sphi 0, %s84
      %s85 = sphi 0, %s82
      %s86 = sphi 0, %s85
      %s102 = sphi 0, %s86
      %s106 = sphi 0, %s106
      %s108 = sphi 0, %s106
      %s109 = sphi 0, %s108
      %s123 = sphi 0, %s109
      %s127 = sphi 0, %s127
      %s129 = sphi 0, %s127
      %s130 = sphi 0, %s129
      %s144 = sphi 0, %s130
      %s148 = sphi 0, %s148
      %s150 = sphi 0, %s148
      %s151 = sphi 0, %s150
      %s165 = sphi 0, %s151
      %s169 = sphi 0, %s169
      %s171 = sphi 0, %s169
      %s172 = sphi 0, %s171
      %s186 = sphi 0, %s172
      %s190 = sphi 0, %s190
      %s192 = sphi 0, %s190
      %s193 = sphi 0, %s192
      %s207 = sphi 0, %s193
      %s211 = sphi 0, %s211
      %s213 = sphi 0, %s211
      %s214 = sphi 0, %s213
      %s228 = sphi 0, %s214
      %s236 = sphi 0, %s238
      %s239 = sphi 0, %s236
      %s240 = sphi 0, %s239
      %s256 = sphi 0, %s240
      %s264 = sphi 0, %s266
      %s267 = sphi 0, %s264
      %s268 = sphi 0, %s267
      %s284 = sphi 0, %s268
    $region4: #{tpu_custom_call.1} parent=1 // loop_header_branch
      %33 = sbr.rel (%p31) target = $region8
    $region5: #{tpu_custom_call.1} parent=1 // loop_body
      %s35 = ssub.s32 %s30, 1
      %s36 = ssub.s32 %s30, 2
      %s43 = sadd.s32 1, %s38
      %p44 = scmp.ge.s32.totalorder %s43, 1
      %s45 = scalar_select %p44, 0, %s43
      %s46 = sadd.s32 1, %s37
      %s47 = scalar_select %p44, %s46, %s37
      %p48 = scmp.ge.s32.totalorder %s47, 2
      %s49 = scalar_select %p48, 0, %s47
      %s50 = ssub.s32 %s37, %s49
      %s51 = ssub.s32 %s38, %s45
      %s52 = sor.u32 %s50, %s51
      %p53 = scmp.eq.s32.totalorder %s52, 0
      %s55 = sadd.s32 %s54, 1
      %s56 = scalar_select %p53, %s54, %s55
      %p59 = pneg %p53
      %p60 = scmp.eq.s32.totalorder %s30, 1
      %p61 = por %p59, %p60
      %p62 = scmp.ne.s32.totalorder %s54, %s57
      %p63 = scmp.eq.s32.totalorder %s30, 0
      %p64 = por %p62, %p63
      %p65 = scmp.ne.s32.totalorder %s54, %s57
      %p66 = scmp.eq.s32.totalorder %s35, 1
      %p67 = por %p65, %p66
      %p68 = scmp.ne.s32.totalorder %s57, %s58
      %p69 = scmp.eq.s32.totalorder %s35, 0
      %p70 = por %p68, %p69
      %p71 = scmp.ne.s32.totalorder %s57, %s58
      %p72 = scmp.eq.s32.totalorder %s36, 1
      %p73 = por %p71, %p72
      %p75 = scmp.ne.s32.totalorder %s58, %s74
      %p76 = scmp.eq.s32.totalorder %s36, 0
      %p77 = por %p75, %p76
      %s78 = ssub.s32 %s37, %s49
      %s79 = ssub.s32 %s38, %s45
      %s80 = sor.u32 %s78, %s79
      %p81 = scmp.eq.s32.totalorder %s80, 0
      %s83 = sadd.s32 %s82, 1
      %s84 = scalar_select %p81, %s82, %s83
      %p87 = pneg %p81
      %p88 = scmp.eq.s32.totalorder %s30, 1
      %p89 = por %p87, %p88
      %p90 = scmp.ne.s32.totalorder %s82, %s85
      %p91 = scmp.eq.s32.totalorder %s30, 0
      %p92 = por %p90, %p91
      %p93 = scmp.ne.s32.totalorder %s82, %s85
      %p94 = scmp.eq.s32.totalorder %s35, 1
      %p95 = por %p93, %p94
      %p96 = scmp.ne.s32.totalorder %s85, %s86
      %p97 = scmp.eq.s32.totalorder %s35, 0
      %p98 = por %p96, %p97
      %p99 = scmp.ne.s32.totalorder %s85, %s86
      %p100 = scmp.eq.s32.totalorder %s36, 1
      %p101 = por %p99, %p100
      %p103 = scmp.ne.s32.totalorder %s86, %s102
      %p104 = scmp.eq.s32.totalorder %s36, 0
      %p105 = por %p103, %p104
      %s107 = sadd.s32 %s106, 1
      %p110 = scmp.eq.s32.totalorder %s30, 1
      %p111 = scmp.ne.s32.totalorder %s106, %s108
      %p112 = scmp.eq.s32.totalorder %s30, 0
      %p113 = por %p111, %p112
      %p114 = scmp.ne.s32.totalorder %s106, %s108
      %p115 = scmp.eq.s32.totalorder %s35, 1
      %p116 = por %p114, %p115
      %p117 = scmp.ne.s32.totalorder %s108, %s109
      %p118 = scmp.eq.s32.totalorder %s35, 0
      %p119 = por %p117, %p118
      %p120 = scmp.ne.s32.totalorder %s108, %s109
      %p121 = scmp.eq.s32.totalorder %s36, 1
      %p122 = por %p120, %p121
      %p124 = scmp.ne.s32.totalorder %s109, %s123
      %p125 = scmp.eq.s32.totalorder %s36, 0
      %p126 = por %p124, %p125
      %s128 = sadd.s32 %s127, 1
      %p131 = scmp.eq.s32.totalorder %s30, 1
      %p132 = scmp.ne.s32.totalorder %s127, %s129
      %p133 = scmp.eq.s32.totalorder %s30, 0
      %p134 = por %p132, %p133
      %p135 = scmp.ne.s32.totalorder %s127, %s129
      %p136 = scmp.eq.s32.totalorder %s35, 1
      %p137 = por %p135, %p136
      %p138 = scmp.ne.s32.totalorder %s129, %s130
      %p139 = scmp.eq.s32.totalorder %s35, 0
      %p140 = por %p138, %p139
      %p141 = scmp.ne.s32.totalorder %s129, %s130
      %p142 = scmp.eq.s32.totalorder %s36, 1
      %p143 = por %p141, %p142
      %p145 = scmp.ne.s32.totalorder %s130, %s144
      %p146 = scmp.eq.s32.totalorder %s36, 0
      %p147 = por %p145, %p146
      %s149 = sadd.s32 %s148, 1
      %p152 = scmp.eq.s32.totalorder %s30, 1
      %p153 = scmp.ne.s32.totalorder %s148, %s150
      %p154 = scmp.eq.s32.totalorder %s30, 0
      %p155 = por %p153, %p154
      %p156 = scmp.ne.s32.totalorder %s148, %s150
      %p157 = scmp.eq.s32.totalorder %s35, 1
      %p158 = por %p156, %p157
      %p159 = scmp.ne.s32.totalorder %s150, %s151
      %p160 = scmp.eq.s32.totalorder %s35, 0
      %p161 = por %p159, %p160
      %p162 = scmp.ne.s32.totalorder %s150, %s151
      %p163 = scmp.eq.s32.totalorder %s36, 1
      %p164 = por %p162, %p163
      %p166 = scmp.ne.s32.totalorder %s151, %s165
      %p167 = scmp.eq.s32.totalorder %s36, 0
      %p168 = por %p166, %p167
      %s170 = sadd.s32 %s169, 1
      %p173 = scmp.eq.s32.totalorder %s30, 1
      %p174 = scmp.ne.s32.totalorder %s169, %s171
      %p175 = scmp.eq.s32.totalorder %s30, 0
      %p176 = por %p174, %p175
      %p177 = scmp.ne.s32.totalorder %s169, %s171
      %p178 = scmp.eq.s32.totalorder %s35, 1
      %p179 = por %p177, %p178
      %p180 = scmp.ne.s32.totalorder %s171, %s172
      %p181 = scmp.eq.s32.totalorder %s35, 0
      %p182 = por %p180, %p181
      %p183 = scmp.ne.s32.totalorder %s171, %s172
      %p184 = scmp.eq.s32.totalorder %s36, 1
      %p185 = por %p183, %p184
      %p187 = scmp.ne.s32.totalorder %s172, %s186
      %p188 = scmp.eq.s32.totalorder %s36, 0
      %p189 = por %p187, %p188
      %s191 = sadd.s32 %s190, 1
      %p194 = scmp.eq.s32.totalorder %s30, 1
      %p195 = scmp.ne.s32.totalorder %s190, %s192
      %p196 = scmp.eq.s32.totalorder %s30, 0
      %p197 = por %p195, %p196
      %p198 = scmp.ne.s32.totalorder %s190, %s192
      %p199 = scmp.eq.s32.totalorder %s35, 1
      %p200 = por %p198, %p199
      %p201 = scmp.ne.s32.totalorder %s192, %s193
      %p202 = scmp.eq.s32.totalorder %s35, 0
      %p203 = por %p201, %p202
      %p204 = scmp.ne.s32.totalorder %s192, %s193
      %p205 = scmp.eq.s32.totalorder %s36, 1
      %p206 = por %p204, %p205
      %p208 = scmp.ne.s32.totalorder %s193, %s207
      %p209 = scmp.eq.s32.totalorder %s36, 0
      %p210 = por %p208, %p209
      %s212 = sadd.s32 %s211, 1
      %p215 = scmp.eq.s32.totalorder %s30, 1
      %p216 = scmp.ne.s32.totalorder %s211, %s213
      %p217 = scmp.eq.s32.totalorder %s30, 0
      %p218 = por %p216, %p217
      %p219 = scmp.ne.s32.totalorder %s211, %s213
      %p220 = scmp.eq.s32.totalorder %s35, 1
      %p221 = por %p219, %p220
      %p222 = scmp.ne.s32.totalorder %s213, %s214
      %p223 = scmp.eq.s32.totalorder %s35, 0
      %p224 = por %p222, %p223
      %p225 = scmp.ne.s32.totalorder %s213, %s214
      %p226 = scmp.eq.s32.totalorder %s36, 1
      %p227 = por %p225, %p226
      %p229 = scmp.ne.s32.totalorder %s214, %s228
      %p230 = scmp.eq.s32.totalorder %s36, 0
      %p231 = por %p229, %p230
      %s232 = ssub.s32 %s37, %s49
      %s233 = ssub.s32 %s38, %s45
      %s234 = sor.u32 %s232, %s233
      %p235 = scmp.eq.s32.totalorder %s234, 0
      %s237 = sadd.s32 %s236, 1
      %s238 = scalar_select %p235, %s236, %s237
      %p241 = pneg %p235
      %p242 = scmp.eq.s32.totalorder %s30, 1
      %p243 = por %p241, %p242
      %p244 = scmp.ne.s32.totalorder %s236, %s239
      %p245 = scmp.eq.s32.totalorder %s30, 0
      %p246 = por %p244, %p245
      %p247 = scmp.ne.s32.totalorder %s236, %s239
      %p248 = scmp.eq.s32.totalorder %s35, 1
      %p249 = por %p247, %p248
      %p250 = scmp.ne.s32.totalorder %s239, %s240
      %p251 = scmp.eq.s32.totalorder %s35, 0
      %p252 = por %p250, %p251
      %p253 = scmp.ne.s32.totalorder %s239, %s240
      %p254 = scmp.eq.s32.totalorder %s36, 1
      %p255 = por %p253, %p254
      %p257 = scmp.ne.s32.totalorder %s240, %s256
      %p258 = scmp.eq.s32.totalorder %s36, 0
      %p259 = por %p257, %p258
      %s260 = ssub.s32 %s37, %s49
      %s261 = ssub.s32 %s38, %s45
      %s262 = sor.u32 %s260, %s261
      %p263 = scmp.eq.s32.totalorder %s262, 0
      %s265 = sadd.s32 %s264, 1
      %s266 = scalar_select %p263, %s264, %s265
      %p269 = pneg %p263
      %p270 = scmp.eq.s32.totalorder %s30, 1
      %p271 = por %p269, %p270
      %p272 = scmp.ne.s32.totalorder %s264, %s267
      %p273 = scmp.eq.s32.totalorder %s30, 0
      %p274 = por %p272, %p273
      %p275 = scmp.ne.s32.totalorder %s264, %s267
      %p276 = scmp.eq.s32.totalorder %s35, 1
      %p277 = por %p275, %p276
      %p278 = scmp.ne.s32.totalorder %s267, %s268
      %p279 = scmp.eq.s32.totalorder %s35, 0
      %p280 = por %p278, %p279
      %p281 = scmp.ne.s32.totalorder %s267, %s268
      %p282 = scmp.eq.s32.totalorder %s36, 1
      %p283 = por %p281, %p282
      %p285 = scmp.ne.s32.totalorder %s268, %s284
      %p286 = scmp.eq.s32.totalorder %s36, 0
      %p287 = por %p285, %p286
      %p288 = scmp.le.s32.totalorder 1, %s30
      %p289 = scmp.lt.s32.totalorder %s30, 3
      %p290 = pnand %p288, %p289
      %p291 = pneg %p290
      // Predicated region
      $region9: #{tpu_custom_call.1} parent=5 // pred_check
        _
      $region10: #{tpu_custom_call.1} parent=5 // pred_check_branch
        %293 = sbr.rel (%p290) target = $region12
      $region11: #{tpu_custom_call.1} parent=5 // pred_region
        %s294 = ssub.s32 %s30, 1
        // Predicated region
        $region13: #{tpu_custom_call.1} parent=11 // pred_check
          %p295 = pneg %p119
        $region14: #{tpu_custom_call.1} parent=11 // pred_check_branch
          %297 = sbr.rel (%p295) target = $region16
        $region15: #{tpu_custom_call.1} parent=11 // pred_region
          _
        $region16: #{tpu_custom_call.1} parent=11 // pred_fallthru
          _
        // Predicated region
        $region17: #{tpu_custom_call.1} parent=11 // pred_check
          %p298 = pneg %p140
        $region18: #{tpu_custom_call.1} parent=11 // pred_check_branch
          %300 = sbr.rel (%p298) target = $region20
        $region19: #{tpu_custom_call.1} parent=11 // pred_region
          _
        $region20: #{tpu_custom_call.1} parent=11 // pred_fallthru
          _
        // Predicated region
        $region21: #{tpu_custom_call.1} parent=11 // pred_check
          %p301 = pneg %p161
        $region22: #{tpu_custom_call.1} parent=11 // pred_check_branch
          %303 = sbr.rel (%p301) target = $region24
        $region23: #{tpu_custom_call.1} parent=11 // pred_region
          _
        $region24: #{tpu_custom_call.1} parent=11 // pred_fallthru
          _
        // Predicated region
        $region25: #{tpu_custom_call.1} parent=11 // pred_check
          %p304 = pneg %p182
        $region26: #{tpu_custom_call.1} parent=11 // pred_check_branch
          %306 = sbr.rel (%p304) target = $region28
        $region27: #{tpu_custom_call.1} parent=11 // pred_region
          %s308 = ssub.s32 192, 192
          %309 = vsyncadd [#allocation8], %s308
          %s310 = sshll.u32 [#allocation9], 4
          %s311 = int_to_ptr.vmem [resolvable:$true] %s310
          %316 = dma.hbm_to_vmem [thread:$0]  %s5, 192, %s311, [#allocation8], 64, 64, 4
        $region28: #{tpu_custom_call.1} parent=11 // pred_fallthru
          _
        // Predicated region
        $region29: #{tpu_custom_call.1} parent=11 // pred_check
          %p317 = pneg %p203
        $region30: #{tpu_custom_call.1} parent=11 // pred_check_branch
          %319 = sbr.rel (%p317) target = $region32
        $region31: #{tpu_custom_call.1} parent=11 // pred_region
          _
        $region32: #{tpu_custom_call.1} parent=11 // pred_fallthru
          _
        // Predicated region
        $region33: #{tpu_custom_call.1} parent=11 // pred_check
          %p320 = pneg %p224
        $region34: #{tpu_custom_call.1} parent=11 // pred_check_branch
          %322 = sbr.rel (%p320) target = $region36
        $region35: #{tpu_custom_call.1} parent=11 // pred_region
          _
        $region36: #{tpu_custom_call.1} parent=11 // pred_fallthru
          _
      $region12: #{tpu_custom_call.1} parent=5 // pred_fallthru
        _
      %p323 = scmp.lt.s32.totalorder %s30, 2
      // Predicated region
      $region37: #{tpu_custom_call.1} parent=5 // pred_check
        %p324 = pneg %p323
      $region38: #{tpu_custom_call.1} parent=5 // pred_check_branch
        %326 = sbr.rel (%p324) target = $region40
      $region39: #{tpu_custom_call.1} parent=5 // pred_region
        // Predicated region
        $region41: #{tpu_custom_call.1} parent=39 // pred_check
          %p327 = pneg %p64
        $region42: #{tpu_custom_call.1} parent=39 // pred_check_branch
          %329 = sbr.rel (%p327) target = $region44
        $region43: #{tpu_custom_call.1} parent=39 // pred_region
          %s330 = sand.u32 %s54, 1
          %s331 = scalar_lea.sflag [#allocation5], %s330
          %s332 = sand.u32 %s54, 1
          %s333 = smul.addr %s332, 4
          %s334 = scalar_lea.vmem [#allocation4], %s333
          %s336 = ssub.s32 64, 64
          %337 = vsyncadd %s331, %s336
          %s338 = sadd.s32 %s38, %s37
          %s339 = smul.addr %s338, 64
          %s340 = scalar_lea.hbm %s0, %s339
          %s342 = sshll.u32 %s334, 4
          %s343 = int_to_ptr.vmem [resolvable:$true] %s342
          %345 = dma.hbm_to_vmem [thread:$0]  %s340, 64, %s343, %s331
        $region44: #{tpu_custom_call.1} parent=39 // pred_fallthru
          _
        // Predicated region
        $region45: #{tpu_custom_call.1} parent=39 // pred_check
          %p346 = pneg %p92
        $region46: #{tpu_custom_call.1} parent=39 // pred_check_branch
          %348 = sbr.rel (%p346) target = $region48
        $region47: #{tpu_custom_call.1} parent=39 // pred_region
          %s349 = sand.u32 %s30, 1
          %s350 = scalar_lea.sflag [#allocation8], %s349
          %s351 = sand.u32 %s82, 1
          %s352 = smul.addr %s351, 4
          %s353 = scalar_lea.vmem [#allocation7], %s352
          %s355 = ssub.s32 64, 64
          %356 = vsyncadd %s350, %s355
          %s357 = sadd.s32 %s38, %s37
          %s358 = smul.addr %s357, 64
          %s359 = scalar_lea.hbm %s1, %s358
          %s361 = sshll.u32 %s353, 4
          %s362 = int_to_ptr.vmem [resolvable:$true] %s361
          %364 = dma.hbm_to_vmem [thread:$0]  %s359, 64, %s362, %s350
        $region48: #{tpu_custom_call.1} parent=39 // pred_fallthru
          _
      $region40: #{tpu_custom_call.1} parent=5 // pred_fallthru
        _
      %p365 = scmp.le.s32.totalorder 1, %s30
      %p366 = scmp.lt.s32.totalorder %s30, 3
      %p367 = pnand %p365, %p366
      %p368 = pneg %p367
      // Predicated region
      $region49: #{tpu_custom_call.1} parent=5 // pred_check
        _
      $region50: #{tpu_custom_call.1} parent=5 // pred_check_branch
        %370 = sbr.rel (%p367) target = $region52
      $region51: #{tpu_custom_call.1} parent=5 // pred_region
        %s371 = ssub.s32 %s30, 1
        %s372 = sand.u32 %s57, 1
        %s373 = scalar_lea.sflag [#allocation5], %s372
        %s374 = sand.u32 %s57, 1
        %s375 = smul.addr %s374, 4
        %s376 = scalar_lea.vmem [#allocation4], %s375
        // Predicated region
        $region53: #{tpu_custom_call.1} parent=51 // pred_check
          %p377 = pneg %p70
        $region54: #{tpu_custom_call.1} parent=51 // pred_check_branch
          %379 = sbr.rel (%p377) target = $region56
        $region55: #{tpu_custom_call.1} parent=51 // pred_region
          %380 = dma.done %s373, 64
        $region56: #{tpu_custom_call.1} parent=51 // pred_fallthru
          _
        %s381 = sand.u32 %s35, 1
        %s382 = scalar_lea.sflag [#allocation8], %s381
        %s383 = sand.u32 %s85, 1
        %s384 = smul.addr %s383, 4
        %s385 = scalar_lea.vmem [#allocation7], %s384
        // Predicated region
        $region57: #{tpu_custom_call.1} parent=51 // pred_check
          %p386 = pneg %p98
        $region58: #{tpu_custom_call.1} parent=51 // pred_check_branch
          %388 = sbr.rel (%p386) target = $region60
        $region59: #{tpu_custom_call.1} parent=51 // pred_region
          %389 = dma.done %s382, 64
        $region60: #{tpu_custom_call.1} parent=51 // pred_fallthru
          _
        // Predicated region
        $region61: #{tpu_custom_call.1} parent=51 // pred_check
          %p390 = pneg %p182
        $region62: #{tpu_custom_call.1} parent=51 // pred_check_branch
          %392 = sbr.rel (%p390) target = $region64
        $region63: #{tpu_custom_call.1} parent=51 // pred_region
          %393 = dma.done [#allocation8], 192
        $region64: #{tpu_custom_call.1} parent=51 // pred_fallthru
          _
        %s394 = sand.u32 %s57, 1
        %s395 = scalar_lea.sflag [#allocation5], %s394
        %s396 = sand.u32 %s57, 1
        %s397 = smul.addr %s396, 4
        %s398 = scalar_lea.vmem [#allocation4], %s397
        %p399 = pneg %p70
        %p400 = pneg %p67
        %s401 = sand.u32 %s35, 1
        %s402 = scalar_lea.sflag [#allocation8], %s401
        %s403 = sand.u32 %s85, 1
        %s404 = smul.addr %s403, 4
        %s405 = scalar_lea.vmem [#allocation7], %s404
        %p406 = pneg %p98
        %p407 = pneg %p95
        %p408 = pneg %p119
        %p409 = pneg %p116
        %p410 = pneg %p140
        %p411 = pneg %p137
        %p412 = pneg %p161
        %p413 = pneg %p158
        %p414 = pneg %p182
        %p415 = pneg %p179
        %p416 = pneg %p203
        %p417 = pneg %p200
        %p418 = pneg %p224
        %p419 = pneg %p221
        %p420 = pneg %p252
        %p421 = pneg %p249
        %s422 = sand.u32 %s239, 1
        %s423 = scalar_lea.sflag [#allocation6], %s422
        %s424 = sand.u32 %s239, 1
        %s425 = smul.addr %s424, 4
        %s426 = scalar_lea.vmem [#allocation10], %s425
        %p427 = pneg %p280
        %p428 = pneg %p277
        %s429 = sand.u32 %s267, 1
        %s430 = scalar_lea.sflag [#allocation12], %s429
        %s431 = sand.u32 %s267, 1
        %s432 = smul.addr %s431, 4
        %s433 = scalar_lea.vmem [#allocation11], %s432
        %v434 = vld [vmem:[%s376] sm:$0xf]
        %v435 = vld [vmem:[%s385] sm:$0xf]
        %s436 = sld [smem:[#allocation2]]
        %s437 = sld [smem:[#allocation3]]
        %v438 = vld [vmem:[%s3] sm:$0xf]
        %v439 = vld [vmem:[%s6] sm:$0xf]
        %v440 = vlaneseq
        %v441 = vand.u32 %v440, 127
        %v442 = vand.u32 %v441, 7
        %vm443 = vcmp.eq.s32.totalorder %v442, 0
        %vm444 = vcmp.eq.s32.totalorder %v442, 7
        %445 = vrot.lane.b32.xlu0 %v435, 1
        %v446 = vpop.permute.xlu0 %445
        %447 = vrot.lane.b32.xlu0 %v435, 127
        %v448 = vpop.permute.xlu0 %447
        %v449 = vsel %vm443, 1, 0
        %vm450 = vcmp.eq.s32.totalorder %v449, 1
        %v451 = vsel %vm450, %v448, %v446
        %v452 = vld [vmem:[%s2] sm:$0xf]
        %s453 = scalar_lea.vmem %s2, 4
        %v454 = vld [vmem:[%s453] sm:$0xf]
        %vm455 = vcmask 31744
        %v457 = vsel %vm455, %v454, 0
        %vm459 = vcmask 1043456
        %v461 = vsel %vm459, %v435, 0
        %463 = vmatprep.subr.mxu0 0.0
        %464 = vmatpush1.msra.mxu0 %v461
        %465 = vmatprep.subr.mxu0 0.0
        %466 = vmatpush1.msra.mxu0 0.0
        %467 = vmatprep.subr.mxu0 0.0
        %468 = vmatpush1.msra.mxu0 0.0
        %469 = vmatprep.subr.mxu0 0.0
        %470 = vmatpush1.msra.mxu0 0.0
        %471 = vmatprep.subr.mxu0 0.0
        %472 = vmatpush1.msra.mxu0 0.0
        %473 = vmatprep.subr.mxu0 0.0
        %474 = vmatpush1.msra.mxu0 0.0
        %475 = vmatprep.subr.mxu0 0.0
        %476 = vmatpush1.msra.mxu0 0.0
        %477 = vmatprep.subr.mxu0 0.0
        %478 = vmatpush1.msra.mxu0 0.0
        %479 = vmatprep.subr.mxu0 0.0
        %480 = vmatpush1.msra.mxu0 0.0
        %481 = vmatprep.subr.mxu0 0.0
        %482 = vmatpush1.msra.mxu0 0.0
        %483 = vmatprep.subr.mxu0 0.0
        %484 = vmatpush1.msra.mxu0 0.0
        %485 = vmatprep.subr.mxu0 0.0
        %486 = vmatpush1.msra.mxu0 0.0
        %487 = vmatprep.subr.mxu0 0.0
        %488 = vmatpush1.msra.mxu0 0.0
        %489 = vmatprep.subr.mxu0 0.0
        %490 = vmatpush1.msra.mxu0 0.0
        %491 = vmatprep.subr.mxu0 0.0
        %492 = vmatpush1.msra.mxu0 0.0
        %493 = vmatprep.subr.mxu0 0.0
        %494 = vmatpush1.msra.mxu0 0.0
        %495 = vmatprep.subr.mxu0 0.0
        %496 = vmatpush1.msra.mxu0 0.0
        %497 = vmatprep.subr.mxu0 0.0
        %498 = vmatpush1.msra.mxu0 0.0
        %499 = vmatprep.subr.mxu0 0.0
        %500 = vmatpush1.msra.mxu0 0.0
        %501 = vmatprep.subr.mxu0 0.0
        %502 = vmatpush1.msra.mxu0 0.0
        %503 = vmatprep.subr.mxu0 0.0
        %504 = vmatpush1.msra.mxu0 0.0
        %505 = vmatprep.subr.mxu0 0.0
        %506 = vmatpush1.msra.mxu0 0.0
        %507 = vmatprep.subr.mxu0 0.0
        %508 = vmatpush1.msra.mxu0 0.0
        %509 = vmatprep.subr.mxu0 0.0
        %510 = vmatpush1.msra.mxu0 0.0
        %511 = vmatprep.subr.mxu0 0.0
        %512 = vmatpush1.msra.mxu0 0.0
        %513 = vmatprep.subr.mxu0 0.0
        %514 = vmatpush1.msra.mxu0 0.0
        %515 = vmatprep.subr.mxu0 0.0
        %516 = vmatpush1.msra.mxu0 0.0
        %517 = vmatprep.subr.mxu0 0.0
        %518 = vmatpush1.msra.mxu0 0.0
        %519 = vmatprep.subr.mxu0 0.0
        %520 = vmatpush1.msra.mxu0 0.0
        %521 = vmatprep.subr.mxu0 0.0
        %522 = vmatpush1.msra.mxu0 0.0
        %523 = vmatprep.subr.mxu0 0.0
        %524 = vmatpush1.msra.mxu0 0.0
        %525 = vmatprep.subr.mxu0 0.0
        %526 = vmatpush1.msra.mxu0 0.0
        %527 = vmatprep.mubr.f32.mxu0 0.0
        %528 = vmatmul.mubr.f32.gmra.mrb[0].mxu0 %v457
        %v529 = vpop.f32.mrb[0].mxu0
        %v530 = vadd.f32 0.0, %v529
        %v531 = vpop.f32.mrb[0].mxu0
        %532 = vdwg.mxu0
        %v534 = vsel %vm455, %v452, 0
        %v537 = vsel %vm459, %v451, 0
        %539 = vmatprep.subr.mxu0 0.0
        %540 = vmatpush1.msra.mxu0 %v537
        %541 = vmatprep.subr.mxu0 0.0
        %542 = vmatpush1.msra.mxu0 0.0
        %543 = vmatprep.subr.mxu0 0.0
        %544 = vmatpush1.msra.mxu0 0.0
        %545 = vmatprep.subr.mxu0 0.0
        %546 = vmatpush1.msra.mxu0 0.0
        %547 = vmatprep.subr.mxu0 0.0
        %548 = vmatpush1.msra.mxu0 0.0
        %549 = vmatprep.subr.mxu0 0.0
        %550 = vmatpush1.msra.mxu0 0.0
        %551 = vmatprep.subr.mxu0 0.0
        %552 = vmatpush1.msra.mxu0 0.0
        %553 = vmatprep.subr.mxu0 0.0
        %554 = vmatpush1.msra.mxu0 0.0
        %555 = vmatprep.subr.mxu0 0.0
        %556 = vmatpush1.msra.mxu0 0.0
        %557 = vmatprep.subr.mxu0 0.0
        %558 = vmatpush1.msra.mxu0 0.0
        %559 = vmatprep.subr.mxu0 0.0
        %560 = vmatpush1.msra.mxu0 0.0
        %561 = vmatprep.subr.mxu0 0.0
        %562 = vmatpush1.msra.mxu0 0.0
        %563 = vmatprep.subr.mxu0 0.0
        %564 = vmatpush1.msra.mxu0 0.0
        %565 = vmatprep.subr.mxu0 0.0
        %566 = vmatpush1.msra.mxu0 0.0
        %567 = vmatprep.subr.mxu0 0.0
        %568 = vmatpush1.msra.mxu0 0.0
        %569 = vmatprep.subr.mxu0 0.0
        %570 = vmatpush1.msra.mxu0 0.0
        %571 = vmatprep.subr.mxu0 0.0
        %572 = vmatpush1.msra.mxu0 0.0
        %573 = vmatprep.subr.mxu0 0.0
        %574 = vmatpush1.msra.mxu0 0.0
        %575 = vmatprep.subr.mxu0 0.0
        %576 = vmatpush1.msra.mxu0 0.0
        %577 = vmatprep.subr.mxu0 0.0
        %578 = vmatpush1.msra.mxu0 0.0
        %579 = vmatprep.subr.mxu0 0.0
        %580 = vmatpush1.msra.mxu0 0.0
        %581 = vmatprep.subr.mxu0 0.0
        %582 = vmatpush1.msra.mxu0 0.0
        %583 = vmatprep.subr.mxu0 0.0
        %584 = vmatpush1.msra.mxu0 0.0
        %585 = vmatprep.subr.mxu0 0.0
        %586 = vmatpush1.msra.mxu0 0.0
        %587 = vmatprep.subr.mxu0 0.0
        %588 = vmatpush1.msra.mxu0 0.0
        %589 = vmatprep.subr.mxu0 0.0
        %590 = vmatpush1.msra.mxu0 0.0
        %591 = vmatprep.subr.mxu0 0.0
        %592 = vmatpush1.msra.mxu0 0.0
        %593 = vmatprep.subr.mxu0 0.0
        %594 = vmatpush1.msra.mxu0 0.0
        %595 = vmatprep.subr.mxu0 0.0
        %596 = vmatpush1.msra.mxu0 0.0
        %597 = vmatprep.subr.mxu0 0.0
        %598 = vmatpush1.msra.mxu0 0.0
        %599 = vmatprep.subr.mxu0 0.0
        %600 = vmatpush1.msra.mxu0 0.0
        %601 = vmatprep.subr.mxu0 0.0
        %602 = vmatpush1.msra.mxu0 0.0
        %603 = vmatprep.mubr.f32.mxu0 0.0
        %604 = vmatmul.mubr.f32.gmra.mrb[0].mxu0 %v534
        %v605 = vpop.f32.mrb[0].mxu0
        %v606 = vadd.f32 %v530, %v605
        %v607 = vpop.f32.mrb[0].mxu0
        %608 = vdwg.mxu0
        %v609 = vsel %vm444, 1, 0
        %vm610 = vcmp.eq.s32.totalorder %v609, 1
        %v611 = vsel %vm610, %v446, %v448
        %s612 = scalar_lea.vmem %s2, 8
        %v613 = vld [vmem:[%s612] sm:$0xf]
        %v615 = vsel %vm455, %v613, 0
        %v618 = vsel %vm459, %v611, 0
        %620 = vmatprep.subr.mxu0 0.0
        %621 = vmatpush1.msra.mxu0 %v618
        %622 = vmatprep.subr.mxu0 0.0
        %623 = vmatpush1.msra.mxu0 0.0
        %624 = vmatprep.subr.mxu0 0.0
        %625 = vmatpush1.msra.mxu0 0.0
        %626 = vmatprep.subr.mxu0 0.0
        %627 = vmatpush1.msra.mxu0 0.0
        %628 = vmatprep.subr.mxu0 0.0
        %629 = vmatpush1.msra.mxu0 0.0
        %630 = vmatprep.subr.mxu0 0.0
        %631 = vmatpush1.msra.mxu0 0.0
        %632 = vmatprep.subr.mxu0 0.0
        %633 = vmatpush1.msra.mxu0 0.0
        %634 = vmatprep.subr.mxu0 0.0
        %635 = vmatpush1.msra.mxu0 0.0
        %636 = vmatprep.subr.mxu0 0.0
        %637 = vmatpush1.msra.mxu0 0.0
        %638 = vmatprep.subr.mxu0 0.0
        %639 = vmatpush1.msra.mxu0 0.0
        %640 = vmatprep.subr.mxu0 0.0
        %641 = vmatpush1.msra.mxu0 0.0
        %642 = vmatprep.subr.mxu0 0.0
        %643 = vmatpush1.msra.mxu0 0.0
        %644 = vmatprep.subr.mxu0 0.0
        %645 = vmatpush1.msra.mxu0 0.0
        %646 = vmatprep.subr.mxu0 0.0
        %647 = vmatpush1.msra.mxu0 0.0
        %648 = vmatprep.subr.mxu0 0.0
        %649 = vmatpush1.msra.mxu0 0.0
        %650 = vmatprep.subr.mxu0 0.0
        %651 = vmatpush1.msra.mxu0 0.0
        %652 = vmatprep.subr.mxu0 0.0
        %653 = vmatpush1.msra.mxu0 0.0
        %654 = vmatprep.subr.mxu0 0.0
        %655 = vmatpush1.msra.mxu0 0.0
        %656 = vmatprep.subr.mxu0 0.0
        %657 = vmatpush1.msra.mxu0 0.0
        %658 = vmatprep.subr.mxu0 0.0
        %659 = vmatpush1.msra.mxu0 0.0
        %660 = vmatprep.subr.mxu0 0.0
        %661 = vmatpush1.msra.mxu0 0.0
        %662 = vmatprep.subr.mxu0 0.0
        %663 = vmatpush1.msra.mxu0 0.0
        %664 = vmatprep.subr.mxu0 0.0
        %665 = vmatpush1.msra.mxu0 0.0
        %666 = vmatprep.subr.mxu0 0.0
        %667 = vmatpush1.msra.mxu0 0.0
        %668 = vmatprep.subr.mxu0 0.0
        %669 = vmatpush1.msra.mxu0 0.0
        %670 = vmatprep.subr.mxu0 0.0
        %671 = vmatpush1.msra.mxu0 0.0
        %672 = vmatprep.subr.mxu0 0.0
        %673 = vmatpush1.msra.mxu0 0.0
        %674 = vmatprep.subr.mxu0 0.0
        %675 = vmatpush1.msra.mxu0 0.0
        %676 = vmatprep.subr.mxu0 0.0
        %677 = vmatpush1.msra.mxu0 0.0
        %678 = vmatprep.subr.mxu0 0.0
        %679 = vmatpush1.msra.mxu0 0.0
        %680 = vmatprep.subr.mxu0 0.0
        %681 = vmatpush1.msra.mxu0 0.0
        %682 = vmatprep.subr.mxu0 0.0
        %683 = vmatpush1.msra.mxu0 0.0
        %684 = vmatprep.mubr.f32.mxu0 0.0
        %685 = vmatmul.mubr.f32.gmra.mrb[0].mxu0 %v615
        %v686 = vpop.f32.mrb[0].mxu0
        %v687 = vadd.f32 0.0, %v686
        %v688 = vpop.f32.mrb[0].mxu0
        %689 = vdwg.mxu0
        %v690 = vadd.f32 %v606, %v687
        %vm691 = vcmp.ge.f32.partialorder %v690, 0.0
        %v692 = vstv %s436
        %v693 = vmul.f32 %v692, %v690
        %v694 = vsel %vm691, %v690, %v693
        %v696 = vsel %vm455, %v438, 0
        %v699 = vsel %vm459, %v694, 0
        %701 = vmatprep.subr.mxu0 0.0
        %702 = vmatpush1.msra.mxu0 %v699
        %703 = vmatprep.subr.mxu0 0.0
        %704 = vmatpush1.msra.mxu0 0.0
        %705 = vmatprep.subr.mxu0 0.0
        %706 = vmatpush1.msra.mxu0 0.0
        %707 = vmatprep.subr.mxu0 0.0
        %708 = vmatpush1.msra.mxu0 0.0
        %709 = vmatprep.subr.mxu0 0.0
        %710 = vmatpush1.msra.mxu0 0.0
        %711 = vmatprep.subr.mxu0 0.0
        %712 = vmatpush1.msra.mxu0 0.0
        %713 = vmatprep.subr.mxu0 0.0
        %714 = vmatpush1.msra.mxu0 0.0
        %715 = vmatprep.subr.mxu0 0.0
        %716 = vmatpush1.msra.mxu0 0.0
        %717 = vmatprep.subr.mxu0 0.0
        %718 = vmatpush1.msra.mxu0 0.0
        %719 = vmatprep.subr.mxu0 0.0
        %720 = vmatpush1.msra.mxu0 0.0
        %721 = vmatprep.subr.mxu0 0.0
        %722 = vmatpush1.msra.mxu0 0.0
        %723 = vmatprep.subr.mxu0 0.0
        %724 = vmatpush1.msra.mxu0 0.0
        %725 = vmatprep.subr.mxu0 0.0
        %726 = vmatpush1.msra.mxu0 0.0
        %727 = vmatprep.subr.mxu0 0.0
        %728 = vmatpush1.msra.mxu0 0.0
        %729 = vmatprep.subr.mxu0 0.0
        %730 = vmatpush1.msra.mxu0 0.0
        %731 = vmatprep.subr.mxu0 0.0
        %732 = vmatpush1.msra.mxu0 0.0
        %733 = vmatprep.subr.mxu0 0.0
        %734 = vmatpush1.msra.mxu0 0.0
        %735 = vmatprep.subr.mxu0 0.0
        %736 = vmatpush1.msra.mxu0 0.0
        %737 = vmatprep.subr.mxu0 0.0
        %738 = vmatpush1.msra.mxu0 0.0
        %739 = vmatprep.subr.mxu0 0.0
        %740 = vmatpush1.msra.mxu0 0.0
        %741 = vmatprep.subr.mxu0 0.0
        %742 = vmatpush1.msra.mxu0 0.0
        %743 = vmatprep.subr.mxu0 0.0
        %744 = vmatpush1.msra.mxu0 0.0
        %745 = vmatprep.subr.mxu0 0.0
        %746 = vmatpush1.msra.mxu0 0.0
        %747 = vmatprep.subr.mxu0 0.0
        %748 = vmatpush1.msra.mxu0 0.0
        %749 = vmatprep.subr.mxu0 0.0
        %750 = vmatpush1.msra.mxu0 0.0
        %751 = vmatprep.subr.mxu0 0.0
        %752 = vmatpush1.msra.mxu0 0.0
        %753 = vmatprep.subr.mxu0 0.0
        %754 = vmatpush1.msra.mxu0 0.0
        %755 = vmatprep.subr.mxu0 0.0
        %756 = vmatpush1.msra.mxu0 0.0
        %757 = vmatprep.subr.mxu0 0.0
        %758 = vmatpush1.msra.mxu0 0.0
        %759 = vmatprep.subr.mxu0 0.0
        %760 = vmatpush1.msra.mxu0 0.0
        %761 = vmatprep.subr.mxu0 0.0
        %762 = vmatpush1.msra.mxu0 0.0
        %763 = vmatprep.subr.mxu0 0.0
        %764 = vmatpush1.msra.mxu0 0.0
        %765 = vmatprep.mubr.f32.mxu0 0.0
        %766 = vmatmul.mubr.f32.gmra.mrb[0].mxu0 %v696
        %v767 = vpop.f32.mrb[0].mxu0
        %v768 = vadd.f32 0.0, %v767
        %v769 = vpop.f32.mrb[0].mxu0
        %770 = vdwg.mxu0
        %v771 = vtanh.pop %v768
        %v772 = vadd.f32 %v434, %v771
        %773 = vrot.lane.b32.xlu0 %v772, 1
        %v774 = vpop.permute.xlu0 %773
        %775 = vrot.lane.b32.xlu0 %v772, 127
        %v776 = vpop.permute.xlu0 %775
        %v777 = vsel %vm450, %v776, %v774
        %v778 = vld [vmem:[#allocation9] sm:$0xf]
        %s779 = scalar_lea.vmem [#allocation9], 4
        %v780 = vld [vmem:[%s779] sm:$0xf]
        %v782 = vsel %vm455, %v780, 0
        %v785 = vsel %vm459, %v772, 0
        %787 = vmatprep.subr.mxu0 0.0
        %788 = vmatpush1.msra.mxu0 %v785
        %789 = vmatprep.subr.mxu0 0.0
        %790 = vmatpush1.msra.mxu0 0.0
        %791 = vmatprep.subr.mxu0 0.0
        %792 = vmatpush1.msra.mxu0 0.0
        %793 = vmatprep.subr.mxu0 0.0
        %794 = vmatpush1.msra.mxu0 0.0
        %795 = vmatprep.subr.mxu0 0.0
        %796 = vmatpush1.msra.mxu0 0.0
        %797 = vmatprep.subr.mxu0 0.0
        %798 = vmatpush1.msra.mxu0 0.0
        %799 = vmatprep.subr.mxu0 0.0
        %800 = vmatpush1.msra.mxu0 0.0
        %801 = vmatprep.subr.mxu0 0.0
        %802 = vmatpush1.msra.mxu0 0.0
        %803 = vmatprep.subr.mxu0 0.0
        %804 = vmatpush1.msra.mxu0 0.0
        %805 = vmatprep.subr.mxu0 0.0
        %806 = vmatpush1.msra.mxu0 0.0
        %807 = vmatprep.subr.mxu0 0.0
        %808 = vmatpush1.msra.mxu0 0.0
        %809 = vmatprep.subr.mxu0 0.0
        %810 = vmatpush1.msra.mxu0 0.0
        %811 = vmatprep.subr.mxu0 0.0
        %812 = vmatpush1.msra.mxu0 0.0
        %813 = vmatprep.subr.mxu0 0.0
        %814 = vmatpush1.msra.mxu0 0.0
        %815 = vmatprep.subr.mxu0 0.0
        %816 = vmatpush1.msra.mxu0 0.0
        %817 = vmatprep.subr.mxu0 0.0
        %818 = vmatpush1.msra.mxu0 0.0
        %819 = vmatprep.subr.mxu0 0.0
        %820 = vmatpush1.msra.mxu0 0.0
        %821 = vmatprep.subr.mxu0 0.0
        %822 = vmatpush1.msra.mxu0 0.0
        %823 = vmatprep.subr.mxu0 0.0
        %824 = vmatpush1.msra.mxu0 0.0
        %825 = vmatprep.subr.mxu0 0.0
        %826 = vmatpush1.msra.mxu0 0.0
        %827 = vmatprep.subr.mxu0 0.0
        %828 = vmatpush1.msra.mxu0 0.0
        %829 = vmatprep.subr.mxu0 0.0
        %830 = vmatpush1.msra.mxu0 0.0
        %831 = vmatprep.subr.mxu0 0.0
        %832 = vmatpush1.msra.mxu0 0.0
        %833 = vmatprep.subr.mxu0 0.0
        %834 = vmatpush1.msra.mxu0 0.0
        %835 = vmatprep.subr.mxu0 0.0
        %836 = vmatpush1.msra.mxu0 0.0
        %837 = vmatprep.subr.mxu0 0.0
        %838 = vmatpush1.msra.mxu0 0.0
        %839 = vmatprep.subr.mxu0 0.0
        %840 = vmatpush1.msra.mxu0 0.0
        %841 = vmatprep.subr.mxu0 0.0
        %842 = vmatpush1.msra.mxu0 0.0
        %843 = vmatprep.subr.mxu0 0.0
        %844 = vmatpush1.msra.mxu0 0.0
        %845 = vmatprep.subr.mxu0 0.0
        %846 = vmatpush1.msra.mxu0 0.0
        %847 = vmatprep.subr.mxu0 0.0
        %848 = vmatpush1.msra.mxu0 0.0
        %849 = vmatprep.subr.mxu0 0.0
        %850 = vmatpush1.msra.mxu0 0.0
        %851 = vmatprep.mubr.f32.mxu0 0.0
        %852 = vmatmul.mubr.f32.gmra.mrb[0].mxu0 %v782
        %v853 = vpop.f32.mrb[0].mxu0
        %v854 = vadd.f32 0.0, %v853
        %v855 = vpop.f32.mrb[0].mxu0
        %856 = vdwg.mxu0
        %v858 = vsel %vm455, %v778, 0
        %v861 = vsel %vm459, %v777, 0
        %863 = vmatprep.subr.mxu0 0.0
        %864 = vmatpush1.msra.mxu0 %v861
        %865 = vmatprep.subr.mxu0 0.0
        %866 = vmatpush1.msra.mxu0 0.0
        %867 = vmatprep.subr.mxu0 0.0
        %868 = vmatpush1.msra.mxu0 0.0
        %869 = vmatprep.subr.mxu0 0.0
        %870 = vmatpush1.msra.mxu0 0.0
        %871 = vmatprep.subr.mxu0 0.0
        %872 = vmatpush1.msra.mxu0 0.0
        %873 = vmatprep.subr.mxu0 0.0
        %874 = vmatpush1.msra.mxu0 0.0
        %875 = vmatprep.subr.mxu0 0.0
        %876 = vmatpush1.msra.mxu0 0.0
        %877 = vmatprep.subr.mxu0 0.0
        %878 = vmatpush1.msra.mxu0 0.0
        %879 = vmatprep.subr.mxu0 0.0
        %880 = vmatpush1.msra.mxu0 0.0
        %881 = vmatprep.subr.mxu0 0.0
        %882 = vmatpush1.msra.mxu0 0.0
        %883 = vmatprep.subr.mxu0 0.0
        %884 = vmatpush1.msra.mxu0 0.0
        %885 = vmatprep.subr.mxu0 0.0
        %886 = vmatpush1.msra.mxu0 0.0
        %887 = vmatprep.subr.mxu0 0.0
        %888 = vmatpush1.msra.mxu0 0.0
        %889 = vmatprep.subr.mxu0 0.0
        %890 = vmatpush1.msra.mxu0 0.0
        %891 = vmatprep.subr.mxu0 0.0
        %892 = vmatpush1.msra.mxu0 0.0
        %893 = vmatprep.subr.mxu0 0.0
        %894 = vmatpush1.msra.mxu0 0.0
        %895 = vmatprep.subr.mxu0 0.0
        %896 = vmatpush1.msra.mxu0 0.0
        %897 = vmatprep.subr.mxu0 0.0
        %898 = vmatpush1.msra.mxu0 0.0
        %899 = vmatprep.subr.mxu0 0.0
        %900 = vmatpush1.msra.mxu0 0.0
        %901 = vmatprep.subr.mxu0 0.0
        %902 = vmatpush1.msra.mxu0 0.0
        %903 = vmatprep.subr.mxu0 0.0
        %904 = vmatpush1.msra.mxu0 0.0
        %905 = vmatprep.subr.mxu0 0.0
        %906 = vmatpush1.msra.mxu0 0.0
        %907 = vmatprep.subr.mxu0 0.0
        %908 = vmatpush1.msra.mxu0 0.0
        %909 = vmatprep.subr.mxu0 0.0
        %910 = vmatpush1.msra.mxu0 0.0
        %911 = vmatprep.subr.mxu0 0.0
        %912 = vmatpush1.msra.mxu0 0.0
        %913 = vmatprep.subr.mxu0 0.0
        %914 = vmatpush1.msra.mxu0 0.0
        %915 = vmatprep.subr.mxu0 0.0
        %916 = vmatpush1.msra.mxu0 0.0
        %917 = vmatprep.subr.mxu0 0.0
        %918 = vmatpush1.msra.mxu0 0.0
        %919 = vmatprep.subr.mxu0 0.0
        %920 = vmatpush1.msra.mxu0 0.0
        %921 = vmatprep.subr.mxu0 0.0
        %922 = vmatpush1.msra.mxu0 0.0
        %923 = vmatprep.subr.mxu0 0.0
        %924 = vmatpush1.msra.mxu0 0.0
        %925 = vmatprep.subr.mxu0 0.0
        %926 = vmatpush1.msra.mxu0 0.0
        %927 = vmatprep.mubr.f32.mxu0 0.0
        %928 = vmatmul.mubr.f32.gmra.mrb[0].mxu0 %v858
        %v929 = vpop.f32.mrb[0].mxu0
        %v930 = vadd.f32 %v854, %v929
        %v931 = vpop.f32.mrb[0].mxu0
        %932 = vdwg.mxu0
        %v933 = vsel %vm610, %v774, %v776
        %s934 = scalar_lea.vmem [#allocation9], 8
        %v935 = vld [vmem:[%s934] sm:$0xf]
        %v937 = vsel %vm455, %v935, 0
        %v940 = vsel %vm459, %v933, 0
        %942 = vmatprep.subr.mxu0 0.0
        %943 = vmatpush1.msra.mxu0 %v940
        %944 = vmatprep.subr.mxu0 0.0
        %945 = vmatpush1.msra.mxu0 0.0
        %946 = vmatprep.subr.mxu0 0.0
        %947 = vmatpush1.msra.mxu0 0.0
        %948 = vmatprep.subr.mxu0 0.0
        %949 = vmatpush1.msra.mxu0 0.0
        %950 = vmatprep.subr.mxu0 0.0
        %951 = vmatpush1.msra.mxu0 0.0
        %952 = vmatprep.subr.mxu0 0.0
        %953 = vmatpush1.msra.mxu0 0.0
        %954 = vmatprep.subr.mxu0 0.0
        %955 = vmatpush1.msra.mxu0 0.0
        %956 = vmatprep.subr.mxu0 0.0
        %957 = vmatpush1.msra.mxu0 0.0
        %958 = vmatprep.subr.mxu0 0.0
        %959 = vmatpush1.msra.mxu0 0.0
        %960 = vmatprep.subr.mxu0 0.0
        %961 = vmatpush1.msra.mxu0 0.0
        %962 = vmatprep.subr.mxu0 0.0
        %963 = vmatpush1.msra.mxu0 0.0
        %964 = vmatprep.subr.mxu0 0.0
        %965 = vmatpush1.msra.mxu0 0.0
        %966 = vmatprep.subr.mxu0 0.0
        %967 = vmatpush1.msra.mxu0 0.0
        %968 = vmatprep.subr.mxu0 0.0
        %969 = vmatpush1.msra.mxu0 0.0
        %970 = vmatprep.subr.mxu0 0.0
        %971 = vmatpush1.msra.mxu0 0.0
        %972 = vmatprep.subr.mxu0 0.0
        %973 = vmatpush1.msra.mxu0 0.0
        %974 = vmatprep.subr.mxu0 0.0
        %975 = vmatpush1.msra.mxu0 0.0
        %976 = vmatprep.subr.mxu0 0.0
        %977 = vmatpush1.msra.mxu0 0.0
        %978 = vmatprep.subr.mxu0 0.0
        %979 = vmatpush1.msra.mxu0 0.0
        %980 = vmatprep.subr.mxu0 0.0
        %981 = vmatpush1.msra.mxu0 0.0
        %982 = vmatprep.subr.mxu0 0.0
        %983 = vmatpush1.msra.mxu0 0.0
        %984 = vmatprep.subr.mxu0 0.0
        %985 = vmatpush1.msra.mxu0 0.0
        %986 = vmatprep.subr.mxu0 0.0
        %987 = vmatpush1.msra.mxu0 0.0
        %988 = vmatprep.subr.mxu0 0.0
        %989 = vmatpush1.msra.mxu0 0.0
        %990 = vmatprep.subr.mxu0 0.0
        %991 = vmatpush1.msra.mxu0 0.0
        %992 = vmatprep.subr.mxu0 0.0
        %993 = vmatpush1.msra.mxu0 0.0
        %994 = vmatprep.subr.mxu0 0.0
        %995 = vmatpush1.msra.mxu0 0.0
        %996 = vmatprep.subr.mxu0 0.0
        %997 = vmatpush1.msra.mxu0 0.0
        %998 = vmatprep.subr.mxu0 0.0
        %999 = vmatpush1.msra.mxu0 0.0
        %1000 = vmatprep.subr.mxu0 0.0
        %1001 = vmatpush1.msra.mxu0 0.0
        %1002 = vmatprep.subr.mxu0 0.0
        %1003 = vmatpush1.msra.mxu0 0.0
        %1004 = vmatprep.subr.mxu0 0.0
        %1005 = vmatpush1.msra.mxu0 0.0
        %1006 = vmatprep.mubr.f32.mxu0 0.0
        %1007 = vmatmul.mubr.f32.gmra.mrb[0].mxu0 %v937
        %v1008 = vpop.f32.mrb[0].mxu0
        %v1009 = vadd.f32 0.0, %v1008
        %v1010 = vpop.f32.mrb[0].mxu0
        %1011 = vdwg.mxu0
        %v1012 = vadd.f32 %v930, %v1009
        %vm1013 = vcmp.ge.f32.partialorder %v1012, 0.0
        %v1014 = vstv %s437
        %v1015 = vmul.f32 %v1014, %v1012
        %v1016 = vsel %vm1013, %v1012, %v1015
        %v1018 = vsel %vm455, %v439, 0
        %v1021 = vsel %vm459, %v1016, 0
        %1023 = vmatprep.subr.mxu0 0.0
        %1024 = vmatpush1.msra.mxu0 %v1021
        %1025 = vmatprep.subr.mxu0 0.0
        %1026 = vmatpush1.msra.mxu0 0.0
        %1027 = vmatprep.subr.mxu0 0.0
        %1028 = vmatpush1.msra.mxu0 0.0
        %1029 = vmatprep.subr.mxu0 0.0
        %1030 = vmatpush1.msra.mxu0 0.0
        %1031 = vmatprep.subr.mxu0 0.0
        %1032 = vmatpush1.msra.mxu0 0.0
        %1033 = vmatprep.subr.mxu0 0.0
        %1034 = vmatpush1.msra.mxu0 0.0
        %1035 = vmatprep.subr.mxu0 0.0
        %1036 = vmatpush1.msra.mxu0 0.0
        %1037 = vmatprep.subr.mxu0 0.0
        %1038 = vmatpush1.msra.mxu0 0.0
        %1039 = vmatprep.subr.mxu0 0.0
        %1040 = vmatpush1.msra.mxu0 0.0
        %1041 = vmatprep.subr.mxu0 0.0
        %1042 = vmatpush1.msra.mxu0 0.0
        %1043 = vmatprep.subr.mxu0 0.0
        %1044 = vmatpush1.msra.mxu0 0.0
        %1045 = vmatprep.subr.mxu0 0.0
        %1046 = vmatpush1.msra.mxu0 0.0
        %1047 = vmatprep.subr.mxu0 0.0
        %1048 = vmatpush1.msra.mxu0 0.0
        %1049 = vmatprep.subr.mxu0 0.0
        %1050 = vmatpush1.msra.mxu0 0.0
        %1051 = vmatprep.subr.mxu0 0.0
        %1052 = vmatpush1.msra.mxu0 0.0
        %1053 = vmatprep.subr.mxu0 0.0
        %1054 = vmatpush1.msra.mxu0 0.0
        %1055 = vmatprep.subr.mxu0 0.0
        %1056 = vmatpush1.msra.mxu0 0.0
        %1057 = vmatprep.subr.mxu0 0.0
        %1058 = vmatpush1.msra.mxu0 0.0
        %1059 = vmatprep.subr.mxu0 0.0
        %1060 = vmatpush1.msra.mxu0 0.0
        %1061 = vmatprep.subr.mxu0 0.0
        %1062 = vmatpush1.msra.mxu0 0.0
        %1063 = vmatprep.subr.mxu0 0.0
        %1064 = vmatpush1.msra.mxu0 0.0
        %1065 = vmatprep.subr.mxu0 0.0
        %1066 = vmatpush1.msra.mxu0 0.0
        %1067 = vmatprep.subr.mxu0 0.0
        %1068 = vmatpush1.msra.mxu0 0.0
        %1069 = vmatprep.subr.mxu0 0.0
        %1070 = vmatpush1.msra.mxu0 0.0
        %1071 = vmatprep.subr.mxu0 0.0
        %1072 = vmatpush1.msra.mxu0 0.0
        %1073 = vmatprep.subr.mxu0 0.0
        %1074 = vmatpush1.msra.mxu0 0.0
        %1075 = vmatprep.subr.mxu0 0.0
        %1076 = vmatpush1.msra.mxu0 0.0
        %1077 = vmatprep.subr.mxu0 0.0
        %1078 = vmatpush1.msra.mxu0 0.0
        %1079 = vmatprep.subr.mxu0 0.0
        %1080 = vmatpush1.msra.mxu0 0.0
        %1081 = vmatprep.subr.mxu0 0.0
        %1082 = vmatpush1.msra.mxu0 0.0
        %1083 = vmatprep.subr.mxu0 0.0
        %1084 = vmatpush1.msra.mxu0 0.0
        %1085 = vmatprep.subr.mxu0 0.0
        %1086 = vmatpush1.msra.mxu0 0.0
        %1087 = vmatprep.mubr.f32.mxu0 0.0
        %1088 = vmatmul.mubr.f32.gmra.mrb[0].mxu0 %v1018
        %v1089 = vpop.f32.mrb[0].mxu0
        %v1090 = vadd.f32 0.0, %v1089
        %v1091 = vpop.f32.mrb[0].mxu0
        %1092 = vdwg.mxu0
        %v1093 = vtanh.pop %v1090
        %v1094 = vsub.f32 %v435, %v1093
        %1095 = vst [vmem:[%s426] sm:$0xf] %v772
        %1096 = vst [vmem:[%s433] sm:$0xf] %v1094
        %s1097 = sand.u32 %s239, 1
        %s1098 = scalar_lea.sflag [#allocation6], %s1097
        %s1099 = sand.u32 %s239, 1
        %s1100 = smul.addr %s1099, 4
        %s1101 = scalar_lea.vmem [#allocation10], %s1100
        %s1102 = sand.u32 %s267, 1
        %s1103 = scalar_lea.sflag [#allocation12], %s1102
        %s1104 = sand.u32 %s267, 1
        %s1105 = smul.addr %s1104, 4
        %s1106 = scalar_lea.vmem [#allocation11], %s1105
        // Predicated region
        $region65: #{tpu_custom_call.1} parent=51 // pred_check
          %p1107 = pneg %p249
        $region66: #{tpu_custom_call.1} parent=51 // pred_check_branch
          %1109 = sbr.rel (%p1107) target = $region68
        $region67: #{tpu_custom_call.1} parent=51 // pred_region
          %s1111 = ssub.s32 64, 64
          %1112 = vsyncadd %s1098, %s1111
          %s1113 = sadd.s32 %s40, %s39
          %s1114 = smul.addr %s1113, 64
          %s1115 = scalar_lea.hbm %s8, %s1114
          %s1117 = sshll.u32 %s1101, 4
          %s1118 = int_to_ptr.vmem [resolvable:$true] %s1117
          %1120 = dma.vmem_to_hbm [thread:$0]  %s1118, 64, %s1115, %s1098
        $region68: #{tpu_custom_call.1} parent=51 // pred_fallthru
          _
        // Predicated region
        $region69: #{tpu_custom_call.1} parent=51 // pred_check
          %p1121 = pneg %p277
        $region70: #{tpu_custom_call.1} parent=51 // pred_check_branch
          %1123 = sbr.rel (%p1121) target = $region72
        $region71: #{tpu_custom_call.1} parent=51 // pred_region
          %s1125 = ssub.s32 64, 64
          %1126 = vsyncadd %s1103, %s1125
          %s1127 = sadd.s32 %s40, %s39
          %s1128 = smul.addr %s1127, 64
          %s1129 = scalar_lea.hbm %s9, %s1128
          %s1131 = sshll.u32 %s1106, 4
          %s1132 = int_to_ptr.vmem [resolvable:$true] %s1131
          %1134 = dma.vmem_to_hbm [thread:$0]  %s1132, 64, %s1129, %s1103
        $region72: #{tpu_custom_call.1} parent=51 // pred_fallthru
          _
      $region52: #{tpu_custom_call.1} parent=5 // pred_fallthru
        _
      %p1135 = scmp.le.s32.totalorder 2, %s30
      // Predicated region
      $region73: #{tpu_custom_call.1} parent=5 // pred_check
        %p1136 = pneg %p1135
      $region74: #{tpu_custom_call.1} parent=5 // pred_check_branch
        %1138 = sbr.rel (%p1136) target = $region76
      $region75: #{tpu_custom_call.1} parent=5 // pred_region
        %s1139 = ssub.s32 %s30, 2
        // Predicated region
        $region77: #{tpu_custom_call.1} parent=75 // pred_check
          %p1140 = pneg %p255
        $region78: #{tpu_custom_call.1} parent=75 // pred_check_branch
          %1142 = sbr.rel (%p1140) target = $region80
        $region79: #{tpu_custom_call.1} parent=75 // pred_region
          %s1143 = sand.u32 %s240, 1
          %s1144 = scalar_lea.sflag [#allocation6], %s1143
          %s1145 = sand.u32 %s240, 1
          %s1146 = smul.addr %s1145, 4
          %s1147 = scalar_lea.vmem [#allocation10], %s1146
          %1148 = dma.done %s1144, 64
        $region80: #{tpu_custom_call.1} parent=75 // pred_fallthru
          _
        // Predicated region
        $region81: #{tpu_custom_call.1} parent=75 // pred_check
          %p1149 = pneg %p283
        $region82: #{tpu_custom_call.1} parent=75 // pred_check_branch
          %1151 = sbr.rel (%p1149) target = $region84
        $region83: #{tpu_custom_call.1} parent=75 // pred_region
          %s1152 = sand.u32 %s268, 1
          %s1153 = scalar_lea.sflag [#allocation12], %s1152
          %s1154 = sand.u32 %s268, 1
          %s1155 = smul.addr %s1154, 4
          %s1156 = scalar_lea.vmem [#allocation11], %s1155
          %1157 = dma.done %s1153, 64
        $region84: #{tpu_custom_call.1} parent=75 // pred_fallthru
          _
      $region76: #{tpu_custom_call.1} parent=5 // pred_fallthru
        _
    $region6: #{tpu_custom_call.1} parent=1 // loop_footer
      %s34 = sadd.s32 1, %s30
    $region7: #{tpu_custom_call.1} parent=1 // loop_footer_branch
      %29 = sbr.rel target = $region3
    $region8: #{tpu_custom_call.1} parent=1 // loop_exit
      _
    %1158 = vsyncpa [#allocation5], 1
    %s1159 = scalar_lea.sflag [#allocation5], 1
    %1160 = vsyncpa %s1159, 1
    %1161 = vsyncpa [#allocation8], 1
    %s1162 = scalar_lea.sflag [#allocation8], 1
    %1163 = vsyncpa %s1162, 1
    %1164 = vsyncpa [#allocation6], 1
    %s1165 = scalar_lea.sflag [#allocation6], 1
    %1166 = vsyncpa %s1165, 1
    %1167 = vsyncpa [#allocation12], 1
    %s1168 = scalar_lea.sflag [#allocation12], 1
    %1169 = vsyncpa %s1168, 1

</llo_original>
